<compile_context>
chip_gen: v7x
topology: tpu7x:2x2x1
jax: 0.10.0
libtpu: 0.0.40
codegen_flags: <defaults>
</compile_context>

<pallas_src>
import jax
import jax.numpy as jnp
from jax.experimental import pallas as pl
from jax.experimental.pallas import tpu as pltpu


def word_attention_kernel(x_ref, w_ref, b_ref, v_ref, out_ref):
    # x_ref:   (S, Bt, H)  activations for Bt batch elements (seq-major; the
    #                      torch permute(1,0,2) is absorbed into indexing)
    # w_ref:   (H, A)      W.weight^T
    # b_ref:   (1, A)      W.bias
    # v_ref:   (1, A)      V.weight kept as a lane-dense row
    # out_ref: (Bt, H)     sentence representations for this batch tile
    S, Bt, H = x_ref.shape
    A = w_ref.shape[1]

    x = x_ref[...]                                   # (S, Bt, H)
    x_f32 = x.astype(jnp.float32)

    # energy = tanh(x @ W^T + b), all Bt*S rows in one MXU matmul.
    # Bt is a multiple of 8, so this reshape is a tile-aligned reinterpretation.
    x2 = x.reshape(S * Bt, H)
    energy = jnp.tanh(
        jnp.dot(x2, w_ref[...], preferred_element_type=jnp.float32)
        + b_ref[...].astype(jnp.float32)
    )                                                # (S*Bt, A) f32

    # attention logits: contract over A with the (1, A) v row (lane reduction).
    energy3 = energy.reshape(S, Bt, A)               # tile-aligned split
    scores = jnp.sum(
        energy3 * v_ref[...].astype(jnp.float32), axis=-1, keepdims=True
    )                                                # (S, Bt, 1)

    # softmax over the sequence axis (torch softmax(dim=1) after the permute).
    m = jnp.max(scores, axis=0, keepdims=True)       # (1, Bt, 1)
    e = jnp.exp(scores - m)                          # (S, Bt, 1)
    denom = jnp.sum(e, axis=0, keepdims=True)        # (1, Bt, 1)
    attn = e * pl.reciprocal(denom, approx=True)     # (S, Bt, 1)

    # sent[b, h] = sum_s attn[s, b] * x[s, b, h]
    sent = jnp.sum(attn * x_f32, axis=0)             # (Bt, H)
    out_ref[...] = sent.astype(out_ref.dtype)


def _round_up(x, m):
    return (x + m - 1) // m * m


def word_attention(lstmencoder, w_weight, w_bias, v_weight, *, block_b=None):
    """
    lstmencoder: (S, B, H)   -- seq-first, like the PyTorch LSTM output
    w_weight:    (A, H)      -- nn.Linear(H, A).weight
    w_bias:      (A,)        -- nn.Linear(H, A).bias
    v_weight:    (1, A)      -- nn.Linear(A, 1, bias=False).weight
    returns:     (B, H)
    """
    S, B, H = lstmencoder.shape
    A = w_weight.shape[0]

    # Batch tile: multiple of 8 (sublane alignment makes in-kernel reshapes
    # layout no-ops), sized so Bt*S rows feed the MXU reasonably (~>=256).
    if block_b is None:
        bt = 8
        while bt * S < 256 and bt < 64:
            bt *= 2
        bt = min(bt, _round_up(B, 8))
    else:
        bt = block_b
    b_pad = _round_up(B, bt)

    x = lstmencoder
    if b_pad != B:
        # Only ragged batches pay this small pad copy; batches already a
        # multiple of the tile take the zero-copy path (no transpose either).
        x = jnp.pad(x, ((0, 0), (0, b_pad - B), (0, 0)))

    wT = jnp.transpose(w_weight)        # (H, A)  tiny, one-time
    b2 = w_bias.reshape(1, A)           # (1, A)
    v2 = v_weight.reshape(1, A)         # (1, A)  lane-dense row (no (A,1) operand)

    out = pl.pallas_call(
        word_attention_kernel,
        out_shape=jax.ShapeDtypeStruct((b_pad, H), x.dtype),
        grid_spec=pltpu.PrefetchScalarGridSpec(
            num_scalar_prefetch=0,
            grid=(b_pad // bt,),
            in_specs=[
                # Read the (S, B, H) activations directly: batch tiled in the
                # middle of the block, no wrapper-side transpose pass.
                pl.BlockSpec((S, bt, H), lambda bi: (0, bi, 0)),
                pl.BlockSpec((H, A), lambda bi: (0, 0)),
                pl.BlockSpec((1, A), lambda bi: (0, 0)),
                pl.BlockSpec((1, A), lambda bi: (0, 0)),
            ],
            out_specs=pl.BlockSpec((bt, H), lambda bi: (bi, 0)),
        ),
        compiler_params=pltpu.CompilerParams(
            dimension_semantics=("parallel",),
        ),
    )(x, wT, b2, v2)
    return out[:B]


def word_attention_ref(lstmencoder, w_weight, w_bias, v_weight):
    # Pure-JAX reference mirroring the PyTorch forward, for a sanity check.
    x = jnp.transpose(lstmencoder, (1, 0, 2))                 # (B, S, H)
    energy = x @ w_weight.T + w_bias                          # (B, S, A)
    attention = jnp.tanh(energy) @ v_weight.T                 # (B, S, 1)
    attention = jnp.squeeze(attention, -1)                    # (B, S)
    attention = jax.nn.softmax(attention, axis=1)             # (B, S)
    sent = jnp.einsum("bs,bsh->bh", attention, x)             # (B, H)
    return sent


if __name__ == "__main__":
    # config: hidden_size=16, bidirectional=True -> H = 32, attention_size A = 16
    S, B = 8, 2
    hidden_size, direction, A = 16, 2, 16
    H = hidden_size * direction

    key = jax.random.PRNGKey(0)
    k0, k1, k2, k3 = jax.random.split(key, 4)
    lstmencoder = jax.random.normal(k0, (S, B, H), dtype=jnp.float32)
    w_weight = 0.1 * jax.random.normal(k1, (A, H), dtype=jnp.float32)  # nn.Linear(H, A).weight
    w_bias = 0.1 * jax.random.normal(k2, (A,), dtype=jnp.float32)      # nn.Linear(H, A).bias
    v_weight = 0.1 * jax.random.normal(k3, (1, A), dtype=jnp.float32)  # nn.Linear(A, 1).weight

    out = word_attention(lstmencoder, w_weight, w_bias, v_weight)
    out = jax.block_until_ready(out)

    ref = word_attention_ref(lstmencoder, w_weight, w_bias, v_weight)
    assert out.shape == (B, H)
    # Slightly loosened tolerance because the softmax denominator uses the
    # approximate EUP reciprocal (pl.reciprocal(..., approx=True)).
    assert jnp.allclose(out, ref, atol=5e-3, rtol=5e-3), "mismatch vs reference"

    print("KERNEL_OK")
</pallas_src>

<mosaic_0001>
module attributes {stable_mosaic.version = 11 : i64} {
  func.func @word_attention_kernel(%arg0: i32, %arg1: memref<8x8x32xf32, #tpu.memory_space<vmem>>, %arg2: memref<32x16xf32, #tpu.memory_space<vmem>>, %arg3: memref<1x16xf32, #tpu.memory_space<vmem>>, %arg4: memref<1x16xf32, #tpu.memory_space<vmem>>, %arg5: memref<8x32xf32, #tpu.memory_space<vmem>>) attributes {dimension_semantics = [#tpu.dimension_semantics<parallel>], iteration_bounds = array<i64: 1>, scalar_prefetch = 0 : i64, scratch_operands = 0 : i64, tpu.core_type = #tpu.core_type<tc>, window_params = [{transform_indices = @transform_0, window_bounds = array<i64: 8, 8, 32>}, {pipeline_mode = #tpu.pipeline_mode<synchronous>, transform_indices = @transform_1, window_bounds = array<i64: 32, 16>}, {pipeline_mode = #tpu.pipeline_mode<synchronous>, transform_indices = @transform_2, window_bounds = array<i64: 1, 16>}, {pipeline_mode = #tpu.pipeline_mode<synchronous>, transform_indices = @transform_3, window_bounds = array<i64: 1, 16>}, {transform_indices = @transform_4, window_bounds = array<i64: 8, 32>}]} {
    %c0 = arith.constant 0 : index
    %c0_0 = arith.constant 0 : index
    %c0_1 = arith.constant 0 : index
    %0 = vector.load %arg1[%c0, %c0_0, %c0_1] : memref<8x8x32xf32, #tpu.memory_space<vmem>>, vector<8x8x32xf32>
    %1 = vector.shape_cast %0 : vector<8x8x32xf32> to vector<64x32xf32>
    %c0_2 = arith.constant 0 : index
    %c0_3 = arith.constant 0 : index
    %2 = vector.load %arg2[%c0_2, %c0_3] : memref<32x16xf32, #tpu.memory_space<vmem>>, vector<32x16xf32>
    %cst = arith.constant dense<0.000000e+00> : vector<64x16xf32>
    %3 = tpu.matmul %1, %2, %cst {dimension_numbers = #tpu.dot_dimension_numbers<[1], [0], [0], [1], [0, 0, 1, 1], [], []>} : vector<64x32xf32>, vector<32x16xf32>, vector<64x16xf32> -> vector<64x16xf32>
    %c0_4 = arith.constant 0 : index
    %c0_5 = arith.constant 0 : index
    %4 = vector.load %arg3[%c0_4, %c0_5] : memref<1x16xf32, #tpu.memory_space<vmem>>, vector<1x16xf32>
    %5 = vector.broadcast %4 : vector<1x16xf32> to vector<64x16xf32>
    %6 = arith.addf %3, %5 : vector<64x16xf32>
    %7 = math.tanh %6 : vector<64x16xf32>
    %8 = vector.shape_cast %7 : vector<64x16xf32> to vector<8x8x16xf32>
    %c0_6 = arith.constant 0 : index
    %c0_7 = arith.constant 0 : index
    %9 = vector.load %arg4[%c0_6, %c0_7] : memref<1x16xf32, #tpu.memory_space<vmem>>, vector<1x16xf32>
    %10 = vector.shape_cast %9 : vector<1x16xf32> to vector<1x1x16xf32>
    %11 = vector.broadcast %10 : vector<1x1x16xf32> to vector<8x8x16xf32>
    %12 = arith.mulf %8, %11 : vector<8x8x16xf32>
    %cst_8 = arith.constant dense<0.000000e+00> : vector<8x8xf32>
    %13 = vector.multi_reduction <add>, %12, %cst_8 [2] : vector<8x8x16xf32> to vector<8x8xf32>
    %14 = vector.shape_cast %13 : vector<8x8xf32> to vector<8x8x1xf32>
    %cst_9 = arith.constant dense<0xFF800000> : vector<8x1xf32>
    %15 = vector.multi_reduction <maximumf>, %14, %cst_9 [0] : vector<8x8x1xf32> to vector<8x1xf32>
    %16 = vector.shape_cast %15 : vector<8x1xf32> to vector<1x8x1xf32>
    %17 = vector.broadcast %16 : vector<1x8x1xf32> to vector<8x8x1xf32>
    %18 = arith.subf %14, %17 : vector<8x8x1xf32>
    %19 = math.exp %18 : vector<8x8x1xf32>
    %cst_10 = arith.constant dense<0.000000e+00> : vector<8x1xf32>
    %20 = vector.multi_reduction <add>, %19, %cst_10 [0] : vector<8x8x1xf32> to vector<8x1xf32>
    %21 = vector.shape_cast %20 : vector<8x1xf32> to vector<1x8x1xf32>
    %22 = tpu.reciprocal %21 {approx = true} : vector<1x8x1xf32> -> vector<1x8x1xf32>
    %23 = vector.broadcast %22 : vector<1x8x1xf32> to vector<8x8x1xf32>
    %24 = arith.mulf %19, %23 : vector<8x8x1xf32>
    %25 = vector.broadcast %24 : vector<8x8x1xf32> to vector<8x8x32xf32>
    %26 = arith.mulf %25, %0 : vector<8x8x32xf32>
    %cst_11 = arith.constant dense<0.000000e+00> : vector<8x32xf32>
    %27 = vector.multi_reduction <add>, %26, %cst_11 [0] : vector<8x8x32xf32> to vector<8x32xf32>
    %c0_12 = arith.constant 0 : index
    %c0_13 = arith.constant 0 : index
    %28 = vector.load %arg5[%c0_12, %c0_13] : memref<8x32xf32, #tpu.memory_space<vmem>>, vector<8x32xf32>
    tpu.vector_store %arg5[%c0_12, %c0_13], %27 {strides = array<i32>} : memref<8x32xf32, #tpu.memory_space<vmem>>, vector<8x32xf32>,
    return
  }
  func.func @transform_0(%arg0: i32) -> (i32, i32, i32) {
    %c0_i32 = arith.constant 0 : i32
    %c0_i32_0 = arith.constant 0 : i32
    %c0_i32_1 = arith.constant 0 : i32
    return %c0_i32, %arg0, %c0_i32_0 : i32, i32, i32
  }
  func.func @transform_1(%arg0: i32) -> (i32, i32) {
    %c0_i32 = arith.constant 0 : i32
    %c0_i32_0 = arith.constant 0 : i32
    %c0_i32_1 = arith.constant 0 : i32
    return %c0_i32, %c0_i32_0 : i32, i32
  }
  func.func @transform_2(%arg0: i32) -> (i32, i32) {
    %c0_i32 = arith.constant 0 : i32
    %c0_i32_0 = arith.constant 0 : i32
    %c0_i32_1 = arith.constant 0 : i32
    return %c0_i32, %c0_i32_0 : i32, i32
  }
  func.func @transform_3(%arg0: i32) -> (i32, i32) {
    %c0_i32 = arith.constant 0 : i32
    %c0_i32_0 = arith.constant 0 : i32
    %c0_i32_1 = arith.constant 0 : i32
    return %c0_i32, %c0_i32_0 : i32, i32
  }
  func.func @transform_4(%arg0: i32) -> (i32, i32) {
    %c0_i32 = arith.constant 0 : i32
    %c0_i32_0 = arith.constant 0 : i32
    return %arg0, %c0_i32 : i32, i32
  }
}

</mosaic_0001>

<llo_original>
// kernel: tpu_custom_call.1
$region0: #{tpu_custom_call.1}
  #allocation0 [shape = 'u32[]', space=smem, size = 0x4, offset = 0x4, fixed_abs, tag = 'smem constant byte address 0x4 - core index']
  #allocation1 [shape = 'u32[144,128]{1,0:T(1,128)}', space=vmem, size = 0x12000, scoped, tag = 'internal scratch']
  %s0 = inlined_call_operand.hbm [shape: f32[8,8,32], index: 0, kind: input, shape index: {}]
  %s1 = inlined_call_operand.vmem [shape: f32[32,16], index: 1, kind: input, shape index: {}]
  %s2 = inlined_call_operand.vmem [shape: f32[1,16], index: 2, kind: input, shape index: {}]
  %s3 = inlined_call_operand.vmem [shape: f32[1,16], index: 3, kind: input, shape index: {}]
  %s4 = inlined_call_operand.hbm [shape: f32[8,32], index: 4, kind: output, shape index: {}]
  %s5 = sld [smem:[#allocation0]]
  $region30: #{tpu_custom_call.1} parent=0
    _
  %s7 = ssub.s32 1, %s5
  %s8 = scalar_select 0, %s7, %s5
  $region1: #{tpu_custom_call.1} parent=0
    #allocation2 [shape = 'u8[32768]{0}', space=vmem, size = 0x8000, scoped, tag = 'input window, operand 0, single buffered']
    #allocation3 [shape = 's32[1]{0}', space=sflag, size = 0x4, scoped, tag = 'scoped memory for tpu_custom_call.1']
    #allocation4 [shape = 's32[1]{0}', space=sflag, size = 0x4, scoped, tag = 'scoped memory for tpu_custom_call.1']
    #allocation5 [shape = 'u8[4096]{0}', space=vmem, size = 0x1000, scoped, tag = 'output window, operand 0, single buffered']
    %9 = vsyncpa [#allocation3], 0
    %10 = vsyncpa [#allocation4], 0
    // Predicated region
    $region2: #{tpu_custom_call.1} parent=1 // pred_check
      _
    $region3: #{tpu_custom_call.1} parent=1 // pred_check_branch
      %12 = sbr.rel (0) target = $region5
    $region4: #{tpu_custom_call.1} parent=1 // pred_region
      %s14 = ssub.s32 1024, 1024
      %15 = vsyncadd [#allocation3], %s14
      %s16 = sshll.u32 [#allocation2], 4
      %s17 = int_to_ptr.vmem [resolvable:$true] %s16
      %22 = dma.hbm_to_vmem [thread:$0]  %s0, 1024, %s17, [#allocation3], 128, 128, 8
    $region5: #{tpu_custom_call.1} parent=1 // pred_fallthru
      _
    // Predicated region
    $region6: #{tpu_custom_call.1} parent=1 // pred_check
      _
    $region7: #{tpu_custom_call.1} parent=1 // pred_check_branch
      %24 = sbr.rel (0) target = $region9
    $region8: #{tpu_custom_call.1} parent=1 // pred_region
      _
    $region9: #{tpu_custom_call.1} parent=1 // pred_fallthru
      _
    // Predicated region
    $region10: #{tpu_custom_call.1} parent=1 // pred_check
      _
    $region11: #{tpu_custom_call.1} parent=1 // pred_check_branch
      %26 = sbr.rel (0) target = $region13
    $region12: #{tpu_custom_call.1} parent=1 // pred_region
      _
    $region13: #{tpu_custom_call.1} parent=1 // pred_fallthru
      _
    // Predicated region
    $region14: #{tpu_custom_call.1} parent=1 // pred_check
      _
    $region15: #{tpu_custom_call.1} parent=1 // pred_check_branch
      %28 = sbr.rel (0) target = $region17
    $region16: #{tpu_custom_call.1} parent=1 // pred_region
      _
    $region17: #{tpu_custom_call.1} parent=1 // pred_fallthru
      _
    // Predicated region
    $region18: #{tpu_custom_call.1} parent=1 // pred_check
      _
    $region19: #{tpu_custom_call.1} parent=1 // pred_check_branch
      %30 = sbr.rel (0) target = $region21
    $region20: #{tpu_custom_call.1} parent=1 // pred_region
      %31 = dma.done [#allocation3], 1024
    $region21: #{tpu_custom_call.1} parent=1 // pred_fallthru
      _
    %v32 = vld [vmem:[#allocation2] sm:$0xff]
    %v33 = vld [vmem:[#allocation2 + $0x8] sm:$0xff]
    %v34 = vld [vmem:[#allocation2 + $0x10] sm:$0xff]
    %v35 = vld [vmem:[#allocation2 + $0x18] sm:$0xff]
    %v36 = vld [vmem:[#allocation2 + $0x20] sm:$0xff]
    %v37 = vld [vmem:[#allocation2 + $0x28] sm:$0xff]
    %v38 = vld [vmem:[#allocation2 + $0x30] sm:$0xff]
    %v39 = vld [vmem:[#allocation2 + $0x38] sm:$0xff]
    %v40 = vld [vmem:[%s1] sm:$0xff]
    %v41 = vld [vmem:[%s1 + $0x8] sm:$0xff]
    %v42 = vld [vmem:[%s1 + $0x10] sm:$0xff]
    %v43 = vld [vmem:[%s1 + $0x18] sm:$0xff]
    %v44 = vld [vmem:[%s2] sm:$0x1]
    %v46 = vlaneseq
    %v47 = vshrl.u32 %v46, 7
    %v48 = vsub.s32 0, %v47
    %v49 = vrot.slane %v44, %v48
    %vm51 = vcmask 261120
    %v53 = vsel %vm51, %v32, 0
    %v56 = vsel %vm51, %v33, 0
    %v59 = vsel %vm51, %v34, 0
    %v62 = vsel %vm51, %v35, 0
    %v65 = vsel %vm51, %v36, 0
    %v68 = vsel %vm51, %v37, 0
    %v71 = vsel %vm51, %v38, 0
    %v74 = vsel %vm51, %v39, 0
    %76 = vmatprep.subr.mxu0 0.0
    %77 = vmatpush1.msra.mxu0 %v40
    %78 = vmatprep.subr.mxu0 0.0
    %79 = vmatpush1.msra.mxu0 %v41
    %80 = vmatprep.subr.mxu0 0.0
    %81 = vmatpush1.msra.mxu0 %v42
    %82 = vmatprep.subr.mxu0 0.0
    %83 = vmatpush1.msra.mxu0 %v43
    %84 = vmatprep.subr.mxu0 0.0
    %85 = vmatpush1.msra.mxu0 0.0
    %86 = vmatprep.subr.mxu0 0.0
    %87 = vmatpush1.msra.mxu0 0.0
    %88 = vmatprep.subr.mxu0 0.0
    %89 = vmatpush1.msra.mxu0 0.0
    %90 = vmatprep.subr.mxu0 0.0
    %91 = vmatpush1.msra.mxu0 0.0
    %92 = vmatprep.subr.mxu0 0.0
    %93 = vmatpush1.msra.mxu0 0.0
    %94 = vmatprep.subr.mxu0 0.0
    %95 = vmatpush1.msra.mxu0 0.0
    %96 = vmatprep.subr.mxu0 0.0
    %97 = vmatpush1.msra.mxu0 0.0
    %98 = vmatprep.subr.mxu0 0.0
    %99 = vmatpush1.msra.mxu0 0.0
    %100 = vmatprep.subr.mxu0 0.0
    %101 = vmatpush1.msra.mxu0 0.0
    %102 = vmatprep.subr.mxu0 0.0
    %103 = vmatpush1.msra.mxu0 0.0
    %104 = vmatprep.subr.mxu0 0.0
    %105 = vmatpush1.msra.mxu0 0.0
    %106 = vmatprep.subr.mxu0 0.0
    %107 = vmatpush1.msra.mxu0 0.0
    %108 = vmatprep.subr.mxu0 0.0
    %109 = vmatpush1.msra.mxu0 0.0
    %110 = vmatprep.subr.mxu0 0.0
    %111 = vmatpush1.msra.mxu0 0.0
    %112 = vmatprep.subr.mxu0 0.0
    %113 = vmatpush1.msra.mxu0 0.0
    %114 = vmatprep.subr.mxu0 0.0
    %115 = vmatpush1.msra.mxu0 0.0
    %116 = vmatprep.subr.mxu0 0.0
    %117 = vmatpush1.msra.mxu0 0.0
    %118 = vmatprep.subr.mxu0 0.0
    %119 = vmatpush1.msra.mxu0 0.0
    %120 = vmatprep.subr.mxu0 0.0
    %121 = vmatpush1.msra.mxu0 0.0
    %122 = vmatprep.subr.mxu0 0.0
    %123 = vmatpush1.msra.mxu0 0.0
    %124 = vmatprep.subr.mxu0 0.0
    %125 = vmatpush1.msra.mxu0 0.0
    %126 = vmatprep.subr.mxu0 0.0
    %127 = vmatpush1.msra.mxu0 0.0
    %128 = vmatprep.subr.mxu0 0.0
    %129 = vmatpush1.msra.mxu0 0.0
    %130 = vmatprep.subr.mxu0 0.0
    %131 = vmatpush1.msra.mxu0 0.0
    %132 = vmatprep.subr.mxu0 0.0
    %133 = vmatpush1.msra.mxu0 0.0
    %134 = vmatprep.subr.mxu0 0.0
    %135 = vmatpush1.msra.mxu0 0.0
    %136 = vmatprep.subr.mxu0 0.0
    %137 = vmatpush1.msra.mxu0 0.0
    %138 = vmatprep.subr.mxu0 0.0
    %139 = vmatpush1.msra.mxu0 0.0
    %140 = vmatprep.mubr.f32.mxu0 0.0
    %141 = vmatmul.mubr.f32.gmra.mrb[0].mxu0 %v53
    %v142 = vpop.f32.mrb[0].mxu0
    %v143 = vadd.f32 %v49, %v142
    %v144 = vpop.f32.mrb[0].mxu0
    %145 = vmatprep.mubr.f32.mxu0 0.0
    %146 = vmatmul.mubr.f32.gmra.mrb[0].mxu0 %v56
    %v147 = vpop.f32.mrb[0].mxu0
    %v148 = vadd.f32 %v49, %v147
    %v149 = vpop.f32.mrb[0].mxu0
    %150 = vmatprep.mubr.f32.mxu0 0.0
    %151 = vmatmul.mubr.f32.gmra.mrb[0].mxu0 %v59
    %v152 = vpop.f32.mrb[0].mxu0
    %v153 = vadd.f32 %v49, %v152
    %v154 = vpop.f32.mrb[0].mxu0
    %155 = vmatprep.mubr.f32.mxu0 0.0
    %156 = vmatmul.mubr.f32.gmra.mrb[0].mxu0 %v62
    %v157 = vpop.f32.mrb[0].mxu0
    %v158 = vadd.f32 %v49, %v157
    %v159 = vpop.f32.mrb[0].mxu0
    %160 = vmatprep.mubr.f32.mxu0 0.0
    %161 = vmatmul.mubr.f32.gmra.mrb[0].mxu0 %v65
    %v162 = vpop.f32.mrb[0].mxu0
    %v163 = vadd.f32 %v49, %v162
    %v164 = vpop.f32.mrb[0].mxu0
    %165 = vmatprep.mubr.f32.mxu0 0.0
    %166 = vmatmul.mubr.f32.gmra.mrb[0].mxu0 %v68
    %v167 = vpop.f32.mrb[0].mxu0
    %v168 = vadd.f32 %v49, %v167
    %v169 = vpop.f32.mrb[0].mxu0
    %170 = vmatprep.mubr.f32.mxu0 0.0
    %171 = vmatmul.mubr.f32.gmra.mrb[0].mxu0 %v71
    %v172 = vpop.f32.mrb[0].mxu0
    %v173 = vadd.f32 %v49, %v172
    %v174 = vpop.f32.mrb[0].mxu0
    %175 = vmatprep.mubr.f32.mxu0 0.0
    %176 = vmatmul.mubr.f32.gmra.mrb[0].mxu0 %v74
    %v177 = vpop.f32.mrb[0].mxu0
    %v178 = vadd.f32 %v49, %v177
    %v179 = vpop.f32.mrb[0].mxu0
    %180 = vdwg.mxu0
    %v181 = vtanh.pop %v143
    %v182 = vtanh.pop %v148
    %v183 = vtanh.pop %v153
    %v184 = vtanh.pop %v158
    %v185 = vtanh.pop %v163
    %v186 = vtanh.pop %v168
    %v187 = vtanh.pop %v173
    %v188 = vtanh.pop %v178
    %v189 = vld [vmem:[%s3] sm:$0x1]
    %v191 = vlaneseq
    %v192 = vshrl.u32 %v191, 7
    %v193 = vsub.s32 0, %v192
    %v194 = vrot.slane %v189, %v193
    %v196 = vmul.f32 %v181, %v194
    %v197 = vmul.f32 %v182, %v194
    %v198 = vmul.f32 %v183, %v194
    %v199 = vmul.f32 %v184, %v194
    %v200 = vmul.f32 %v185, %v194
    %v201 = vmul.f32 %v186, %v194
    %v202 = vmul.f32 %v187, %v194
    %v203 = vmul.f32 %v188, %v194
    %vm204 = vcmask 130048
    %v205 = vsel %vm204, %v196, 0.0
    %206 = vadd.xlane.f32.xlu0 %v205
    %v207 = vpop.xlane.xlu0 %206
    %v208 = vsel %vm204, %v197, 0.0
    %209 = vadd.xlane.f32.xlu0 %v208
    %v210 = vpop.xlane.xlu0 %209
    %v211 = vsel %vm204, %v198, 0.0
    %212 = vadd.xlane.f32.xlu0 %v211
    %v213 = vpop.xlane.xlu0 %212
    %v214 = vsel %vm204, %v199, 0.0
    %215 = vadd.xlane.f32.xlu0 %v214
    %v216 = vpop.xlane.xlu0 %215
    %v217 = vsel %vm204, %v200, 0.0
    %218 = vadd.xlane.f32.xlu0 %v217
    %v219 = vpop.xlane.xlu0 %218
    %v220 = vsel %vm204, %v201, 0.0
    %221 = vadd.xlane.f32.xlu0 %v220
    %v222 = vpop.xlane.xlu0 %221
    %v223 = vsel %vm204, %v202, 0.0
    %224 = vadd.xlane.f32.xlu0 %v223
    %v225 = vpop.xlane.xlu0 %224
    %v226 = vsel %vm204, %v203, 0.0
    %227 = vadd.xlane.f32.xlu0 %v226
    %v228 = vpop.xlane.xlu0 %227
    %v229 = vmax.f32 %v207, %v219
    %v230 = vmax.f32 %v210, %v222
    %v231 = vmax.f32 %v213, %v225
    %v232 = vmax.f32 %v216, %v228
    %v233 = vmax.f32 %v229, %v230
    %v234 = vmax.f32 %v231, %v232
    %v235 = vmax.f32 %v233, %v234
    %v236 = vsub.f32 %v207, %v235
    %v237 = vsub.f32 %v210, %v235
    %v238 = vsub.f32 %v213, %v235
    %v239 = vsub.f32 %v216, %v235
    %v240 = vsub.f32 %v219, %v235
    %v241 = vsub.f32 %v222, %v235
    %v242 = vsub.f32 %v225, %v235
    %v243 = vsub.f32 %v228, %v235
    %v244 = vmul.f32 %v236, 1.442695
    %v245 = vpow.pop %v244
    %v246 = vmul.f32 %v237, 1.442695
    %v247 = vpow.pop %v246
    %v248 = vmul.f32 %v238, 1.442695
    %v249 = vpow.pop %v248
    %v250 = vmul.f32 %v239, 1.442695
    %v251 = vpow.pop %v250
    %v252 = vmul.f32 %v240, 1.442695
    %v253 = vpow.pop %v252
    %v254 = vmul.f32 %v241, 1.442695
    %v255 = vpow.pop %v254
    %v256 = vmul.f32 %v242, 1.442695
    %v257 = vpow.pop %v256
    %v258 = vmul.f32 %v243, 1.442695
    %v259 = vpow.pop %v258
    %v260 = vadd.f32 %v245, %v247
    %v261 = vadd.f32 %v260, %v249
    %v262 = vadd.f32 %v261, %v251
    %v263 = vadd.f32 %v262, %v253
    %v264 = vadd.f32 %v263, %v255
    %v265 = vadd.f32 %v264, %v257
    %v266 = vadd.f32 %v265, %v259
    %v267 = vrcp.pop %v266
    %v268 = vmul.f32 %v245, %v267
    %v269 = vmul.f32 %v247, %v267
    %v270 = vmul.f32 %v249, %v267
    %v271 = vmul.f32 %v251, %v267
    %v272 = vmul.f32 %v253, %v267
    %v273 = vmul.f32 %v255, %v267
    %v274 = vmul.f32 %v257, %v267
    %v275 = vmul.f32 %v259, %v267
    %v276 = vmul.f32 %v268, %v32
    %v277 = vmul.f32 %v269, %v33
    %v278 = vmul.f32 %v270, %v34
    %v279 = vmul.f32 %v271, %v35
    %v280 = vmul.f32 %v272, %v36
    %v281 = vmul.f32 %v273, %v37
    %v282 = vmul.f32 %v274, %v38
    %v283 = vmul.f32 %v275, %v39
    %v284 = vsel %vm51, %v276, 0.0
    %v285 = vsel %vm51, %v277, 0.0
    %v286 = vadd.f32 %v284, %v285
    %v287 = vsel %vm51, %v278, 0.0
    %v288 = vadd.f32 %v286, %v287
    %v289 = vsel %vm51, %v279, 0.0
    %v290 = vadd.f32 %v288, %v289
    %v291 = vsel %vm51, %v280, 0.0
    %v292 = vadd.f32 %v290, %v291
    %v293 = vsel %vm51, %v281, 0.0
    %v294 = vadd.f32 %v292, %v293
    %v295 = vsel %vm51, %v282, 0.0
    %v296 = vadd.f32 %v294, %v295
    %v297 = vsel %vm51, %v283, 0.0
    %v298 = vadd.f32 %v296, %v297
    %299 = vst.msk [vmem:[#allocation5] sm:$0xff] %vm51, %v298
    // Predicated region
    $region22: #{tpu_custom_call.1} parent=1 // pred_check
      _
    $region23: #{tpu_custom_call.1} parent=1 // pred_check_branch
      %301 = sbr.rel (0) target = $region25
    $region24: #{tpu_custom_call.1} parent=1 // pred_region
      %s303 = ssub.s32 128, 128
      %304 = vsyncadd [#allocation4], %s303
      %s306 = sshll.u32 [#allocation5], 4
      %s307 = int_to_ptr.vmem [resolvable:$true] %s306
      %309 = dma.vmem_to_hbm [thread:$0]  %s307, 128, %s4, [#allocation4]
    $region25: #{tpu_custom_call.1} parent=1 // pred_fallthru
      _
    // Predicated region
    $region26: #{tpu_custom_call.1} parent=1 // pred_check
      _
    $region27: #{tpu_custom_call.1} parent=1 // pred_check_branch
      %311 = sbr.rel (0) target = $region29
    $region28: #{tpu_custom_call.1} parent=1 // pred_region
      %312 = dma.done [#allocation4], 128
    $region29: #{tpu_custom_call.1} parent=1 // pred_fallthru
      _
    %313 = vsyncpa [#allocation3], 1
    %314 = vsyncpa [#allocation4], 1

</llo_original>
